<compile_context>
chip_gen: v6e
topology: v6e:2x2x1
jax: 0.10.0
libtpu: 0.0.40
codegen_flags: <defaults>
</compile_context>

<pallas_src>
import functools

import jax
import jax.numpy as jnp
from jax.experimental import pallas as pl
from jax.experimental.pallas import tpu as pltpu


def _cdiv(a: int, b: int) -> int:
    return -(-a // b)


def _round_up(a: int, b: int) -> int:
    return ((a + b - 1) // b) * b


def _pow_static(p, order: float):
    """p ** order, special-casing small integer orders at trace time.

    General jnp.power lowers to exp(order * log(p)) -> 2 extra EUP
    transcendentals per element; for integer orders a repeated VPU multiply is
    exact and keeps the kernel at ~2 transcendentals/element.
    """
    i_order = int(round(order))
    if abs(order - i_order) < 1e-12 and 1 <= i_order <= 8:
        r = p
        for _ in range(i_order - 1):
            r = r * p
        return r
    return jnp.power(p, order)


def _tentropy_partial_kernel(x_ref, num_ref, den_ref, wsum_ref, *,
                             n_sample: int, tiles_per_split: int,
                             inv_t: float, order: float, needs_mask: bool):
    j = pl.program_id(1)

    # Zero this split's resident accumulators on its first row tile.
    @pl.when(j == 0)
    def _init():
        num_ref[...] = jnp.zeros_like(num_ref)
        den_ref[...] = jnp.zeros_like(den_ref)
        wsum_ref[...] = jnp.zeros_like(wsum_ref)

    x = x_ref[...].astype(jnp.float32)                 # (tile_rows, n_class)
    tile_rows = x.shape[0]

    if needs_mask:
        # Rows >= n_sample are either the undefined tail of a partial boundary
        # DMA or a clamped duplicate tile; zero them *before* any arithmetic
        # so garbage (inf/NaN bits) can never reach the accumulators.
        s = pl.program_id(0)
        row0 = (s * tiles_per_split + j) * tile_rows   # nominal (unclamped) start
        rows = row0 + jax.lax.broadcasted_iota(jnp.int32, (tile_rows, 1), 0)
        valid = rows < n_sample
        x = jnp.where(valid, x, 0.0)

    # softmax(x / t, axis=1); divide-by-t folded into a trace-time constant
    # multiply.  Exact reciprocal: one op per row, negligible, keeps 1e-5 tol.
    z = x * inv_t
    z = z - jnp.max(z, axis=1, keepdims=True)
    ez = jnp.exp(z)
    p = ez * pl.reciprocal(jnp.sum(ez, axis=1, keepdims=True), approx=False)

    # Per-row (un-normalized) entropy weight: w = 1 + exp(-H(p)).
    entropy = -jnp.sum(p * jnp.log(p + 1e-5), axis=1, keepdims=True)
    w = 1.0 + jnp.exp(-entropy)                        # (tile_rows, 1)

    p_den = p
    if needs_mask:
        w = jnp.where(valid, w, 0.0)
        p_den = jnp.where(valid, p, 0.0)

    p_ord = _pow_static(p, order)                      # (tile_rows, n_class)

    # Streaming column-wise accumulation into lane-dense (1, 1, C) blocks.
    num_ref[...] += jnp.sum(p_ord * w, axis=0, keepdims=True)[None]
    den_ref[...] += jnp.sum(p_den, axis=0, keepdims=True)[None]
    wsum_ref[...] += jnp.sum(w, axis=0, keepdims=True)[None]   # lane broadcast


def _pick_tile_rows(n_sample: int, n_class: int) -> int:
    """Row tile: multiple of 8, one f32 tile (lane-padded to 128) ~<= 2 MiB."""
    padded_c = _round_up(n_class, 128)
    by_vmem = max(8, ((2 * 1024 * 1024) // (4 * padded_c)) // 8 * 8)
    return max(8, min(4096, by_vmem, _round_up(n_sample, 8)))


def tentropy_loss(output: jax.Array, t: float = 2.0, order: float = 2.0,
                  *, tile_rows: int | None = None) -> jax.Array:
    """Pallas TPU implementation of TEntropyLoss.forward."""
    n_sample, n_class = output.shape
    t = float(t)
    order = float(order)

    if tile_rows is None:
        tile_rows = _pick_tile_rows(n_sample, n_class)
    tile_rows = max(8, _round_up(min(tile_rows, _round_up(n_sample, 8)), 8))

    n_tiles = _cdiv(n_sample, tile_rows)
    # Leading "parallel" axis: 2-way split of the row tiles (second v7x core).
    n_splits = 2 if n_tiles >= 2 else 1
    tiles_per_split = _cdiv(n_tiles, n_splits)
    # Masking needed whenever the (rectangular) grid covers more rows than the
    # array has: partial boundary tile and/or clamped duplicate tiles.
    needs_mask = (n_splits * tiles_per_split * tile_rows) != n_sample

    kernel = functools.partial(
        _tentropy_partial_kernel,
        n_sample=n_sample, tiles_per_split=tiles_per_split,
        inv_t=1.0 / t, order=order, needs_mask=needs_mask)

    def x_index_map(s, j):
        idx = s * tiles_per_split + j
        # Clamp so no block starts beyond the array; the duplicated tile's
        # contribution is zeroed in-kernel via the nominal-row mask.
        return (jnp.minimum(idx, n_tiles - 1), 0)

    acc_shape = jax.ShapeDtypeStruct((n_splits, 1, n_class), jnp.float32)
    acc_spec = pl.BlockSpec((1, 1, n_class), lambda s, j: (s, 0, 0))

    num, den, wsum = pl.pallas_call(
        kernel,
        out_shape=(acc_shape, acc_shape, acc_shape),
        grid=(n_splits, tiles_per_split),
        in_specs=[pl.BlockSpec((tile_rows, n_class), x_index_map)],
        out_specs=(acc_spec, acc_spec, acc_spec),
        compiler_params=pltpu.CompilerParams(
            dimension_semantics=("parallel", "arbitrary"),
            vmem_limit_bytes=32 * 1024 * 1024),
    )(output)

    # Tiny scalar epilogue: combine per-split partials and apply the global
    # entropy-weight normalization (it factors out of the row sums).
    num_c = jnp.sum(num[:, 0, :], axis=0)              # (n_class,)
    den_c = jnp.sum(den[:, 0, :], axis=0)              # (n_class,)
    sum_w = jnp.sum(wsum[:, 0, 0])
    tent = jnp.sum(num_c / den_c)
    return -(n_sample * tent / sum_w) / (n_class * (order - 1.0))


def _reference(output, t=2.0, order=2.0):
    """Pure-JAX reference mirroring the PyTorch module."""
    n_sample, n_class = output.shape
    softmax_out = jax.nn.softmax(output / t, axis=1)
    entropy = -jnp.sum(softmax_out * jnp.log(softmax_out + 1e-5), axis=1)
    w = 1.0 + jnp.exp(-entropy)
    w = (n_sample * w / jnp.sum(w))[:, None]
    tent = jnp.power(softmax_out, order) * w
    tent = jnp.sum(tent, axis=0) / jnp.sum(softmax_out, axis=0)
    return -jnp.sum(tent) / (n_class * (order - 1.0))


if __name__ == "__main__":
    key = jax.random.PRNGKey(0)
    k1, k2, k3 = jax.random.split(key, 3)

    # Small logits matrix matching the module's (n_sample, n_class) layout.
    out_small = jax.random.normal(k1, (8, 16), dtype=jnp.float32)
    loss_small = jax.block_until_ready(tentropy_loss(out_small, t=2.0, order=2.0))
    ref_small = _reference(out_small, t=2.0, order=2.0)
    assert jnp.allclose(loss_small, ref_small, rtol=1e-5, atol=1e-5), (loss_small, ref_small)

    # Larger shape; with default tile sizing this is a single big row tile.
    out_big = jax.random.normal(k2, (1200, 32), dtype=jnp.float32)
    loss_big = jax.block_until_ready(tentropy_loss(out_big, t=2.0, order=2.0))
    ref_big = _reference(out_big, t=2.0, order=2.0)
    assert jnp.allclose(loss_big, ref_big, rtol=1e-5, atol=1e-5), (loss_big, ref_big)

    # Forced small tile: exercises multi-tile streaming, the 2-way parallel
    # split, a partial boundary tile, and a clamped (fully masked) duplicate
    # tile — all without any host-side padding copy.
    out_mask = jax.random.normal(k3, (1100, 32), dtype=jnp.float32)
    loss_mask = jax.block_until_ready(
        tentropy_loss(out_mask, t=2.0, order=2.0, tile_rows=128))
    ref_mask = _reference(out_mask, t=2.0, order=2.0)
    assert jnp.allclose(loss_mask, ref_mask, rtol=1e-5, atol=1e-5), (loss_mask, ref_mask)

    print("KERNEL_OK")
</pallas_src>

<mosaic_0001>
module attributes {stable_mosaic.version = 11 : i64} {
  func.func @_tentropy_partial_kernel(%arg0: i32, %arg1: i32, %arg2: memref<8x16xf32, #tpu.memory_space<vmem>>, %arg3: memref<1x1x16xf32, #tpu.memory_space<vmem>>, %arg4: memref<1x1x16xf32, #tpu.memory_space<vmem>>, %arg5: memref<1x1x16xf32, #tpu.memory_space<vmem>>) attributes {dimension_semantics = [#tpu.dimension_semantics<parallel>, #tpu.dimension_semantics<arbitrary>], iteration_bounds = array<i64: 1, 1>, scalar_prefetch = 0 : i64, scratch_operands = 0 : i64, tpu.core_type = #tpu.core_type<tc>, window_params = [{transform_indices = @transform_0, window_bounds = array<i64: 8, 16>}, {transform_indices = @transform_1, window_bounds = array<i64: 1, 1, 16>}, {transform_indices = @transform_2, window_bounds = array<i64: 1, 1, 16>}, {transform_indices = @transform_3, window_bounds = array<i64: 1, 1, 16>}]} {
    %c0_i32 = arith.constant 0 : i32
    %0 = arith.cmpi eq, %arg1, %c0_i32 : i32
    %1 = arith.extui %0 : i1 to i32
    %c0_i32_0 = arith.constant 0 : i32
    %2 = arith.cmpi ne, %1, %c0_i32_0 : i32
    scf.if %2 {
      %cst_30 = arith.constant 0.000000e+00 : f32
      %51 = vector.broadcast %cst_30 : f32 to vector<1x1x16xf32>
      %c0_31 = arith.constant 0 : index
      %c0_32 = arith.constant 0 : index
      %c0_33 = arith.constant 0 : index
      %52 = vector.load %arg3[%c0_31, %c0_32, %c0_33] : memref<1x1x16xf32, #tpu.memory_space<vmem>>, vector<1x1x16xf32>
      tpu.vector_store %arg3[%c0_31, %c0_32, %c0_33], %51 {strides = array<i32>} : memref<1x1x16xf32, #tpu.memory_space<vmem>>, vector<1x1x16xf32>,
      %cst_34 = arith.constant 0.000000e+00 : f32
      %53 = vector.broadcast %cst_34 : f32 to vector<1x1x16xf32>
      %c0_35 = arith.constant 0 : index
      %c0_36 = arith.constant 0 : index
      %c0_37 = arith.constant 0 : index
      %54 = vector.load %arg4[%c0_35, %c0_36, %c0_37] : memref<1x1x16xf32, #tpu.memory_space<vmem>>, vector<1x1x16xf32>
      tpu.vector_store %arg4[%c0_35, %c0_36, %c0_37], %53 {strides = array<i32>} : memref<1x1x16xf32, #tpu.memory_space<vmem>>, vector<1x1x16xf32>,
      %cst_38 = arith.constant 0.000000e+00 : f32
      %55 = vector.broadcast %cst_38 : f32 to vector<1x1x16xf32>
      %c0_39 = arith.constant 0 : index
      %c0_40 = arith.constant 0 : index
      %c0_41 = arith.constant 0 : index
      %56 = vector.load %arg5[%c0_39, %c0_40, %c0_41] : memref<1x1x16xf32, #tpu.memory_space<vmem>>, vector<1x1x16xf32>
      tpu.vector_store %arg5[%c0_39, %c0_40, %c0_41], %55 {strides = array<i32>} : memref<1x1x16xf32, #tpu.memory_space<vmem>>, vector<1x1x16xf32>,
    } else {
    }
    %c0 = arith.constant 0 : index
    %c0_1 = arith.constant 0 : index
    %3 = vector.load %arg2[%c0, %c0_1] : memref<8x16xf32, #tpu.memory_space<vmem>>, vector<8x16xf32>
    %cst = arith.constant 5.000000e-01 : f32
    %4 = vector.broadcast %cst : f32 to vector<8x16xf32>
    %5 = arith.mulf %3, %4 : vector<8x16xf32>
    %cst_2 = arith.constant dense<0xFF800000> : vector<8xf32>
    %6 = vector.multi_reduction <maximumf>, %5, %cst_2 [1] : vector<8x16xf32> to vector<8xf32>
    %7 = vector.shape_cast %6 : vector<8xf32> to vector<8x1xf32>
    %8 = vector.broadcast %7 : vector<8x1xf32> to vector<8x16xf32>
    %9 = arith.subf %5, %8 : vector<8x16xf32>
    %10 = math.exp %9 : vector<8x16xf32>
    %cst_3 = arith.constant dense<0.000000e+00> : vector<8xf32>
    %11 = vector.multi_reduction <add>, %10, %cst_3 [1] : vector<8x16xf32> to vector<8xf32>
    %12 = vector.shape_cast %11 : vector<8xf32> to vector<8x1xf32>
    %13 = tpu.reciprocal %12 : vector<8x1xf32> -> vector<8x1xf32>
    %14 = vector.broadcast %13 : vector<8x1xf32> to vector<8x16xf32>
    %15 = arith.mulf %10, %14 : vector<8x16xf32>
    %cst_4 = arith.constant 9.99999974E-6 : f32
    %16 = vector.broadcast %cst_4 : f32 to vector<8x16xf32>
    %17 = arith.addf %15, %16 : vector<8x16xf32>
    %18 = math.log %17 : vector<8x16xf32>
    %19 = arith.mulf %15, %18 : vector<8x16xf32>
    %cst_5 = arith.constant dense<0.000000e+00> : vector<8xf32>
    %20 = vector.multi_reduction <add>, %19, %cst_5 [1] : vector<8x16xf32> to vector<8xf32>
    %21 = vector.shape_cast %20 : vector<8xf32> to vector<8x1xf32>
    %cst_6 = arith.constant 0.000000e+00 : f32
    %22 = vector.broadcast %cst_6 : f32 to vector<8x1xf32>
    %23 = arith.subf %22, %21 : vector<8x1xf32>
    %cst_7 = arith.constant 0.000000e+00 : f32
    %24 = vector.broadcast %cst_7 : f32 to vector<8x1xf32>
    %25 = arith.subf %24, %23 : vector<8x1xf32>
    %26 = math.exp %25 : vector<8x1xf32>
    %cst_8 = arith.constant 1.000000e+00 : f32
    %27 = vector.broadcast %cst_8 : f32 to vector<8x1xf32>
    %28 = arith.addf %27, %26 : vector<8x1xf32>
    %29 = arith.mulf %15, %15 : vector<8x16xf32>
    %c0_9 = arith.constant 0 : index
    %c0_10 = arith.constant 0 : index
    %c0_11 = arith.constant 0 : index
    %30 = vector.load %arg3[%c0_9, %c0_10, %c0_11] : memref<1x1x16xf32, #tpu.memory_space<vmem>>, vector<1x1x16xf32>
    %31 = vector.broadcast %28 : vector<8x1xf32> to vector<8x16xf32>
    %32 = arith.mulf %29, %31 : vector<8x16xf32>
    %cst_12 = arith.constant dense<0.000000e+00> : vector<16xf32>
    %33 = vector.multi_reduction <add>, %32, %cst_12 [0] : vector<8x16xf32> to vector<16xf32>
    %34 = vector.shape_cast %33 : vector<16xf32> to vector<1x16xf32>
    %35 = vector.shape_cast %34 : vector<1x16xf32> to vector<1x1x16xf32>
    %36 = arith.addf %30, %35 : vector<1x1x16xf32>
    %c0_13 = arith.constant 0 : index
    %c0_14 = arith.constant 0 : index
    %c0_15 = arith.constant 0 : index
    %37 = vector.load %arg3[%c0_13, %c0_14, %c0_15] : memref<1x1x16xf32, #tpu.memory_space<vmem>>, vector<1x1x16xf32>
    tpu.vector_store %arg3[%c0_13, %c0_14, %c0_15], %36 {strides = array<i32>} : memref<1x1x16xf32, #tpu.memory_space<vmem>>, vector<1x1x16xf32>,
    %c0_16 = arith.constant 0 : index
    %c0_17 = arith.constant 0 : index
    %c0_18 = arith.constant 0 : index
    %38 = vector.load %arg4[%c0_16, %c0_17, %c0_18] : memref<1x1x16xf32, #tpu.memory_space<vmem>>, vector<1x1x16xf32>
    %cst_19 = arith.constant dense<0.000000e+00> : vector<16xf32>
    %39 = vector.multi_reduction <add>, %15, %cst_19 [0] : vector<8x16xf32> to vector<16xf32>
    %40 = vector.shape_cast %39 : vector<16xf32> to vector<1x16xf32>
    %41 = vector.shape_cast %40 : vector<1x16xf32> to vector<1x1x16xf32>
    %42 = arith.addf %38, %41 : vector<1x1x16xf32>
    %c0_20 = arith.constant 0 : index
    %c0_21 = arith.constant 0 : index
    %c0_22 = arith.constant 0 : index
    %43 = vector.load %arg4[%c0_20, %c0_21, %c0_22] : memref<1x1x16xf32, #tpu.memory_space<vmem>>, vector<1x1x16xf32>
    tpu.vector_store %arg4[%c0_20, %c0_21, %c0_22], %42 {strides = array<i32>} : memref<1x1x16xf32, #tpu.memory_space<vmem>>, vector<1x1x16xf32>,
    %c0_23 = arith.constant 0 : index
    %c0_24 = arith.constant 0 : index
    %c0_25 = arith.constant 0 : index
    %44 = vector.load %arg5[%c0_23, %c0_24, %c0_25] : memref<1x1x16xf32, #tpu.memory_space<vmem>>, vector<1x1x16xf32>
    %cst_26 = arith.constant dense<0.000000e+00> : vector<1xf32>
    %45 = vector.multi_reduction <add>, %28, %cst_26 [0] : vector<8x1xf32> to vector<1xf32>
    %46 = vector.shape_cast %45 : vector<1xf32> to vector<1x1xf32>
    %47 = vector.shape_cast %46 : vector<1x1xf32> to vector<1x1x1xf32>
    %48 = vector.broadcast %47 : vector<1x1x1xf32> to vector<1x1x16xf32>
    %49 = arith.addf %44, %48 : vector<1x1x16xf32>
    %c0_27 = arith.constant 0 : index
    %c0_28 = arith.constant 0 : index
    %c0_29 = arith.constant 0 : index
    %50 = vector.load %arg5[%c0_27, %c0_28, %c0_29] : memref<1x1x16xf32, #tpu.memory_space<vmem>>, vector<1x1x16xf32>
    tpu.vector_store %arg5[%c0_27, %c0_28, %c0_29], %49 {strides = array<i32>} : memref<1x1x16xf32, #tpu.memory_space<vmem>>, vector<1x1x16xf32>,
    return
  }
  func.func @transform_0(%arg0: i32, %arg1: i32) -> (i32, i32) {
    %c1_i32 = arith.constant 1 : i32
    %0 = arith.muli %arg0, %c1_i32 : i32
    %1 = arith.addi %0, %arg1 : i32
    %c0_i32 = arith.constant 0 : i32
    %2 = arith.minsi %1, %c0_i32 : i32
    %c0_i32_0 = arith.constant 0 : i32
    %c0_i32_1 = arith.constant 0 : i32
    return %2, %c0_i32_0 : i32, i32
  }
  func.func @transform_1(%arg0: i32, %arg1: i32) -> (i32, i32, i32) {
    %c0_i32 = arith.constant 0 : i32
    %c0_i32_0 = arith.constant 0 : i32
    %c0_i32_1 = arith.constant 0 : i32
    return %arg0, %c0_i32, %c0_i32_0 : i32, i32, i32
  }
  func.func @transform_2(%arg0: i32, %arg1: i32) -> (i32, i32, i32) {
    %c0_i32 = arith.constant 0 : i32
    %c0_i32_0 = arith.constant 0 : i32
    %c0_i32_1 = arith.constant 0 : i32
    return %arg0, %c0_i32, %c0_i32_0 : i32, i32, i32
  }
  func.func @transform_3(%arg0: i32, %arg1: i32) -> (i32, i32, i32) {
    %c0_i32 = arith.constant 0 : i32
    %c0_i32_0 = arith.constant 0 : i32
    %c0_i32_1 = arith.constant 0 : i32
    return %arg0, %c0_i32, %c0_i32_0 : i32, i32, i32
  }
}

</mosaic_0001>

<llo_original>
// kernel: tpu_custom_call.1
$region0: #{tpu_custom_call.1}
  #allocation0 [shape = 'u32[]', space=smem, size = 0x4, offset = 0x4, fixed_abs, tag = 'smem constant byte address 0x4 - core index']
  #allocation1 [shape = 'u32[144,128]{1,0:T(1,128)}', space=vmem, size = 0x12000, scoped, tag = 'internal scratch']
  %s0 = inlined_call_operand.hbm [shape: f32[8,16], index: 0, kind: input, shape index: {}]
  %s1 = inlined_call_operand.hbm [shape: f32[1,1,16], index: 1, kind: output, shape index: {0}]
  %s2 = inlined_call_operand.hbm [shape: f32[1,1,16], index: 2, kind: output, shape index: {1}]
  %s3 = inlined_call_operand.hbm [shape: f32[1,1,16], index: 3, kind: output, shape index: {2}]
  %4 = xla_tuple %s1, %s2, %s3
  %s5 = sld [smem:[#allocation0]]
  $region38: #{tpu_custom_call.1} parent=0
    _
  %s7 = ssub.s32 1, %s5
  %s8 = scalar_select 0, %s7, %s5
  $region1: #{tpu_custom_call.1} parent=0
    #allocation2 [shape = 'u8[4096]{0}', space=vmem, size = 0x1000, scoped, tag = 'input window, operand 0, single buffered']
    #allocation3 [shape = 's32[1]{0}', space=sflag, size = 0x4, scoped, tag = 'scoped memory for tpu_custom_call.1']
    #allocation4 [shape = 's32[1]{0}', space=sflag, size = 0x4, scoped, tag = 'scoped memory for tpu_custom_call.1']
    #allocation5 [shape = 'u8[512]{0}', space=vmem, size = 0x400, scoped, tag = 'output window, operand 0, single buffered']
    #allocation6 [shape = 'u8[512]{0}', space=vmem, size = 0x400, scoped, tag = 'output window, operand 1, single buffered']
    #allocation7 [shape = 's32[1]{0}', space=sflag, size = 0x4, scoped, tag = 'scoped memory for tpu_custom_call.1']
    #allocation8 [shape = 'u8[512]{0}', space=vmem, size = 0x400, scoped, tag = 'output window, operand 2, single buffered']
    %9 = vsyncpa [#allocation3], 0
    %10 = vsyncpa [#allocation4], 0
    %11 = vsyncpa [#allocation7], 0
    // Predicated region
    $region2: #{tpu_custom_call.1} parent=1 // pred_check
      _
    $region3: #{tpu_custom_call.1} parent=1 // pred_check_branch
      %13 = sbr.rel (0) target = $region5
    $region4: #{tpu_custom_call.1} parent=1 // pred_region
      %s14 = sadd.s32 0, 0
      %p15 = scmp.lt.s32.totalorder %s14, 0
      %s16 = scalar_select %p15, %s14, 0
      %s18 = ssub.s32 128, 128
      %19 = vsyncadd [#allocation3], %s18
      %s20 = smul.addr %s16, 128
      %s21 = scalar_lea.hbm %s0, %s20
      %s23 = sshll.u32 [#allocation2], 4
      %s24 = int_to_ptr.vmem [resolvable:$true] %s23
      %26 = dma.hbm_to_vmem [thread:$0]  %s21, 128, %s24, [#allocation3]
    $region5: #{tpu_custom_call.1} parent=1 // pred_fallthru
      _
    // Predicated region
    $region6: #{tpu_custom_call.1} parent=1 // pred_check
      _
    $region7: #{tpu_custom_call.1} parent=1 // pred_check_branch
      %28 = sbr.rel (0) target = $region9
    $region8: #{tpu_custom_call.1} parent=1 // pred_region
      %29 = dma.done [#allocation3], 128
    $region9: #{tpu_custom_call.1} parent=1 // pred_fallthru
      _
    %s30 = sadd.s32 0, 0
    %p31 = scmp.lt.s32.totalorder %s30, 0
    %s32 = scalar_select %p31, %s30, 0
    %p33 = scmp.eq.s32.totalorder 0, 0
    // Predicated region
    $region10: #{tpu_custom_call.1} parent=1 // pred_check
      %p34 = pneg %p33
    $region11: #{tpu_custom_call.1} parent=1 // pred_check_branch
      %36 = sbr.rel (%p34) target = $region13
    $region12: #{tpu_custom_call.1} parent=1 // pred_region
      %vm37 = vcmask 122880
      %38 = vst.msk [vmem:[#allocation5] sm:$0x1] %vm37, 0.0
      %39 = vst.msk [vmem:[#allocation6] sm:$0x1] %vm37, 0.0
      %40 = vst.msk [vmem:[#allocation8] sm:$0x1] %vm37, 0.0
    $region13: #{tpu_custom_call.1} parent=1 // pred_fallthru
      _
    %v41 = vld [vmem:[#allocation2] sm:$0xff]
    %v42 = vmul.f32 %v41, 0.5
    %vm43 = vcmask 130048
    %v44 = vsel %vm43, %v42, -inf
    %45 = vmax.xlane.f32.xlu0 %v44
    %v46 = vpop.xlane.xlu0 %45
    %v47 = vsub.f32 %v42, %v46
    %v48 = vmul.f32 %v47, 1.442695
    %v49 = vpow.pop %v48
    %v50 = vsel %vm43, %v49, 0.0
    %51 = vadd.xlane.f32.xlu0 %v50
    %v52 = vpop.xlane.xlu0 %51
    %v53 = vrcp.pop %v52
    %v54 = vmul.f32 %v49, %v53
    %v55 = vadd.f32 %v54, 1e-05
    %v56 = vlog2.pop %v55
    %v57 = vmul.f32 %v56, 0.6931472
    %v58 = vmul.f32 %v54, %v57
    %v59 = vsel %vm43, %v58, 0.0
    %60 = vadd.xlane.f32.xlu0 %v59
    %v61 = vpop.xlane.xlu0 %60
    %v62 = vsub.f32 0.0, %v61
    %v63 = vsub.f32 0.0, %v62
    %v64 = vmul.f32 %v63, 1.442695
    %v65 = vpow.pop %v64
    %v66 = vadd.f32 %v65, 1.0
    %v67 = vmul.f32 %v54, %v54
    %v68 = vld [vmem:[#allocation5] sm:$0x1]
    %v69 = vmul.f32 %v67, %v66
    %v70 = vsel %vm43, %v69, 0.0
    %v71 = vrot.slane %v70, 4
    %v72 = vadd.f32 %v70, %v71
    %v73 = vrot.slane %v72, 2
    %v74 = vadd.f32 %v72, %v73
    %v75 = vrot.slane %v74, 1
    %v76 = vadd.f32 %v74, %v75
    %v77 = vadd.f32 %v68, %v76
    %vm78 = vcmask 122880
    %79 = vst.msk [vmem:[#allocation5] sm:$0x1] %vm78, %v77
    %v80 = vld [vmem:[#allocation6] sm:$0x1]
    %v81 = vsel %vm43, %v54, 0.0
    %v82 = vrot.slane %v81, 4
    %v83 = vadd.f32 %v81, %v82
    %v84 = vrot.slane %v83, 2
    %v85 = vadd.f32 %v83, %v84
    %v86 = vrot.slane %v85, 1
    %v87 = vadd.f32 %v85, %v86
    %v88 = vadd.f32 %v80, %v87
    %89 = vst.msk [vmem:[#allocation6] sm:$0x1] %vm78, %v88
    %v90 = vld [vmem:[#allocation8] sm:$0x1]
    %v91 = vrot.slane %v66, 4
    %v92 = vadd.f32 %v66, %v91
    %v93 = vrot.slane %v92, 2
    %v94 = vadd.f32 %v92, %v93
    %v95 = vrot.slane %v94, 1
    %v96 = vadd.f32 %v94, %v95
    %v97 = vadd.f32 %v90, %v96
    %98 = vst.msk [vmem:[#allocation8] sm:$0x1] %vm78, %v97
    // Predicated region
    $region14: #{tpu_custom_call.1} parent=1 // pred_check
      _
    $region15: #{tpu_custom_call.1} parent=1 // pred_check_branch
      %100 = sbr.rel (0) target = $region17
    $region16: #{tpu_custom_call.1} parent=1 // pred_region
      %s102 = ssub.s32 16, 16
      %103 = vsyncadd [#allocation4], %s102
      %s105 = sshll.u32 [#allocation5], 4
      %s106 = int_to_ptr.vmem [resolvable:$true] %s105
      %108 = dma.vmem_to_hbm [thread:$0]  %s106, 16, %s1, [#allocation4]
    $region17: #{tpu_custom_call.1} parent=1 // pred_fallthru
      _
    // Predicated region
    $region18: #{tpu_custom_call.1} parent=1 // pred_check
      _
    $region19: #{tpu_custom_call.1} parent=1 // pred_check_branch
      %110 = sbr.rel (0) target = $region21
    $region20: #{tpu_custom_call.1} parent=1 // pred_region
      %s112 = ssub.s32 16, 16
      %113 = vsyncadd [#allocation7], %s112
      %s115 = sshll.u32 [#allocation6], 4
      %s116 = int_to_ptr.vmem [resolvable:$true] %s115
      %118 = dma.vmem_to_hbm [thread:$0]  %s116, 16, %s2, [#allocation7]
    $region21: #{tpu_custom_call.1} parent=1 // pred_fallthru
      _
    // Predicated region
    $region22: #{tpu_custom_call.1} parent=1 // pred_check
      _
    $region23: #{tpu_custom_call.1} parent=1 // pred_check_branch
      %120 = sbr.rel (0) target = $region25
    $region24: #{tpu_custom_call.1} parent=1 // pred_region
      %s122 = ssub.s32 16, 16
      %123 = vsyncadd [#allocation7], %s122
      %s125 = sshll.u32 [#allocation8], 4
      %s126 = int_to_ptr.vmem [resolvable:$true] %s125
      %128 = dma.vmem_to_hbm [thread:$0]  %s126, 16, %s3, [#allocation7]
    $region25: #{tpu_custom_call.1} parent=1 // pred_fallthru
      _
    // Predicated region
    $region26: #{tpu_custom_call.1} parent=1 // pred_check
      _
    $region27: #{tpu_custom_call.1} parent=1 // pred_check_branch
      %130 = sbr.rel (0) target = $region29
    $region28: #{tpu_custom_call.1} parent=1 // pred_region
      %131 = dma.done [#allocation4], 16
    $region29: #{tpu_custom_call.1} parent=1 // pred_fallthru
      _
    // Predicated region
    $region30: #{tpu_custom_call.1} parent=1 // pred_check
      _
    $region31: #{tpu_custom_call.1} parent=1 // pred_check_branch
      %133 = sbr.rel (0) target = $region33
    $region32: #{tpu_custom_call.1} parent=1 // pred_region
      %134 = dma.done [#allocation7], 16
    $region33: #{tpu_custom_call.1} parent=1 // pred_fallthru
      _
    // Predicated region
    $region34: #{tpu_custom_call.1} parent=1 // pred_check
      _
    $region35: #{tpu_custom_call.1} parent=1 // pred_check_branch
      %136 = sbr.rel (0) target = $region37
    $region36: #{tpu_custom_call.1} parent=1 // pred_region
      %137 = dma.done [#allocation7], 16
    $region37: #{tpu_custom_call.1} parent=1 // pred_fallthru
      _
    %138 = vsyncpa [#allocation3], 1
    %139 = vsyncpa [#allocation4], 1
    %140 = vsyncpa [#allocation7], 1

</llo_original>
